<compile_context>
chip_gen: v5e
topology: v5e:2x2
jax: 0.10.0
libtpu: 0.0.40
codegen_flags: <defaults>
</compile_context>

<pallas_src>
import functools

import jax
import jax.numpy as jnp
from jax.experimental import pallas as pl
from jax.experimental.pallas import tpu as pltpu


LANES = 128
# ~2 MiB per block buffer (byte-based, dtype-agnostic). Input + output, each
# double-buffered, is ~8 MiB of live VMEM — safely under every generation's
# default scoped limit, and well past the ~85% HBM-roofline knee.
TARGET_TILE_BYTES = 2 * 1024 * 1024
# Slabs larger than this get >= 2 grid blocks so both v7x TensorCores are used.
MULTI_BLOCK_BYTES = 512 * 1024


def _round_up(v: int, m: int) -> int:
    return -(-v // m) * m


def _sigmoid_kernel(x_ref, o_ref, *, compute_dtype):
    # Exact single-transcendental sigmoid: sigmoid(x) = 0.5*tanh(0.5*x) + 0.5.
    # tanh occupies the EUP slot; the mul/add ride the VALU, so the kernel
    # stays purely HBM/DMA-bound even for narrow-dtype I/O on v6e/v7x.
    x = x_ref[...].astype(compute_dtype)
    y = jnp.tanh(x * 0.5) * 0.5 + 0.5
    o_ref[...] = y.astype(o_ref.dtype)


def _has_bf16_vector_units() -> bool:
    # v6e ("Trillium") and v7x have bf16 VPU/EUP; v5e and older do not.
    try:
        kind = jax.devices()[0].device_kind.lower()
    except Exception:
        return False
    return ("v6" in kind) or ("v7" in kind) or ("trillium" in kind)


def _compute_dtype(x_dtype):
    """f32 compute everywhere except native bf16 on chips with bf16 VPU/EUP."""
    if x_dtype == jnp.bfloat16 and _has_bf16_vector_units():
        return jnp.bfloat16
    return jnp.float32


def _pick_width(n: int) -> int:
    """Widest lane-dense slab width dividing n (n is a multiple of 128)."""
    for w in (1024, 512, 256, 128):
        if n % w == 0:
            return w
    raise ValueError("n must be a multiple of 128")


def _run_slab(flat: jax.Array, orig_dtype, compute_dtype) -> jax.Array:
    """Run the sigmoid kernel over a 128-aligned flat array; returns flat out."""
    n = flat.shape[0]
    width = _pick_width(n)
    rows = n // width
    slab = flat.reshape(rows, width)

    dt_size = jnp.dtype(orig_dtype).itemsize
    max_rows = max(8, (TARGET_TILE_BYTES // (width * dt_size)) // 8 * 8)
    total_bytes = n * dt_size

    if rows <= 8:
        # Single block covering the full extent (always a legal block shape).
        row_tile = rows
    elif total_bytes > MULTI_BLOCK_BYTES:
        # Force >= 2 blocks (8-aligned) so the parallel axis can split across
        # TensorCores; last block may be a masked partial edge block.
        row_tile = min(max_rows, _round_up(pl.cdiv(rows, 2), 8))
    else:
        row_tile = rows if rows <= max_rows else max_rows

    grid = (pl.cdiv(rows, row_tile),)
    kernel = functools.partial(_sigmoid_kernel, compute_dtype=compute_dtype)

    out = pl.pallas_call(
        kernel,
        out_shape=jax.ShapeDtypeStruct((rows, width), orig_dtype),
        grid_spec=pltpu.PrefetchScalarGridSpec(
            num_scalar_prefetch=0,
            grid=grid,
            in_specs=[pl.BlockSpec((row_tile, width), lambda i: (i, 0))],
            out_specs=pl.BlockSpec((row_tile, width), lambda i: (i, 0)),
        ),
        compiler_params=pltpu.CompilerParams(
            dimension_semantics=("parallel",),
        ),
    )(slab)
    return out.reshape(-1)


def tutu_forward(x: jax.Array) -> jax.Array:
    """Elementwise sigmoid matching torch.nn.Sigmoid semantics."""
    orig_shape = x.shape
    orig_dtype = x.dtype
    compute_dtype = _compute_dtype(orig_dtype)

    flat = x.reshape(-1)
    n = flat.shape[0]
    if n == 0:
        return x

    rem = n % LANES
    if rem == 0:
        out_flat = _run_slab(flat, orig_dtype, compute_dtype)
    else:
        aligned = n - rem
        if aligned == 0:
            # Tensor smaller than one lane row: pad by < 128 elements (tiny).
            padded = jnp.concatenate(
                [flat, jnp.zeros((LANES - n,), dtype=orig_dtype)]
            )
            out_flat = _run_slab(padded, orig_dtype, compute_dtype)[:n]
        else:
            # Kernel on the 128-aligned prefix; the < 128-element tail is
            # computed in plain XLA (no full-tensor pad copy).
            head = _run_slab(flat[:aligned], orig_dtype, compute_dtype)
            tail = jax.nn.sigmoid(
                flat[aligned:].astype(compute_dtype)
            ).astype(orig_dtype)
            out_flat = jnp.concatenate([head, tail])

    return out_flat.reshape(orig_shape)


if __name__ == "__main__":
    key = jax.random.PRNGKey(0)

    # Primary: small NCHW input consistent with the module: (B=2, C=4, H=16, W=16).
    x = jax.random.normal(key, (2, 4, 16, 16), dtype=jnp.float32)
    y = tutu_forward(x)
    jax.block_until_ready(y)
    ref = jax.nn.sigmoid(x)
    assert y.shape == x.shape and y.dtype == x.dtype
    assert jnp.allclose(y, ref, atol=2e-3, rtol=0), float(jnp.max(jnp.abs(y - ref)))

    # (600, 1024): multi-block grid (>= 2 blocks, masked partial edge block).
    k1, k2 = jax.random.split(key)
    x2 = jax.random.normal(k1, (600, 1024), dtype=jnp.float32)
    y2 = tutu_forward(x2)
    jax.block_until_ready(y2)
    assert jnp.allclose(y2, jax.nn.sigmoid(x2), atol=2e-3, rtol=0)

    # (3, 5, 7): numel not a multiple of 128 -> ragged fallback path.
    x3 = jax.random.normal(k2, (3, 5, 7), dtype=jnp.float32)
    y3 = tutu_forward(x3)
    jax.block_until_ready(y3)
    assert y3.shape == x3.shape
    assert jnp.allclose(y3, jax.nn.sigmoid(x3), atol=2e-3, rtol=0)

    print("KERNEL_OK")
</pallas_src>

<mosaic_0001>
module attributes {stable_mosaic.version = 11 : i64} {
  func.func @_sigmoid_kernel(%arg0: i32, %arg1: memref<2x1024xf32, #tpu.memory_space<vmem>>, %arg2: memref<2x1024xf32, #tpu.memory_space<vmem>>) attributes {dimension_semantics = [#tpu.dimension_semantics<parallel>], iteration_bounds = array<i64: 1>, scalar_prefetch = 0 : i64, scratch_operands = 0 : i64, tpu.core_type = #tpu.core_type<tc>, window_params = [{transform_indices = @transform_0, window_bounds = array<i64: 2, 1024>}, {transform_indices = @transform_1, window_bounds = array<i64: 2, 1024>}]} {
    %c0 = arith.constant 0 : index
    %c0_0 = arith.constant 0 : index
    %0 = vector.load %arg1[%c0, %c0_0] : memref<2x1024xf32, #tpu.memory_space<vmem>>, vector<2x1024xf32>
    %cst = arith.constant 5.000000e-01 : f32
    %1 = vector.broadcast %cst : f32 to vector<2x1024xf32>
    %2 = arith.mulf %0, %1 : vector<2x1024xf32>
    %3 = math.tanh %2 : vector<2x1024xf32>
    %cst_1 = arith.constant 5.000000e-01 : f32
    %4 = vector.broadcast %cst_1 : f32 to vector<2x1024xf32>
    %5 = arith.mulf %3, %4 : vector<2x1024xf32>
    %cst_2 = arith.constant 5.000000e-01 : f32
    %6 = vector.broadcast %cst_2 : f32 to vector<2x1024xf32>
    %7 = arith.addf %5, %6 : vector<2x1024xf32>
    %c0_3 = arith.constant 0 : index
    %c0_4 = arith.constant 0 : index
    %8 = vector.load %arg2[%c0_3, %c0_4] : memref<2x1024xf32, #tpu.memory_space<vmem>>, vector<2x1024xf32>
    tpu.vector_store %arg2[%c0_3, %c0_4], %7 {strides = array<i32>} : memref<2x1024xf32, #tpu.memory_space<vmem>>, vector<2x1024xf32>,
    return
  }
  func.func @transform_0(%arg0: i32) -> (i32, i32) {
    %c0_i32 = arith.constant 0 : i32
    %c0_i32_0 = arith.constant 0 : i32
    return %arg0, %c0_i32 : i32, i32
  }
  func.func @transform_1(%arg0: i32) -> (i32, i32) {
    %c0_i32 = arith.constant 0 : i32
    %c0_i32_0 = arith.constant 0 : i32
    return %arg0, %c0_i32 : i32, i32
  }
}

</mosaic_0001>

<llo_original>
// kernel: tpu_custom_call.1
$region0: #{tpu_custom_call.1}
  #allocation0 [shape = 'u32[]', space=smem, size = 0x4, offset = 0x4, fixed_abs, tag = 'smem constant byte address 0x4 - core index']
  #allocation1 [shape = 'u32[72,128]{1,0:T(1,128)}', space=vmem, size = 0x9000, scoped, tag = 'internal scratch']
  %s0 = inlined_call_operand.hbm [shape: f32[2,1024], index: 0, kind: input, shape index: {}]
  %s1 = inlined_call_operand.hbm [shape: f32[2,1024], index: 1, kind: output, shape index: {}]
  %s2 = sld [smem:[#allocation0]]
  $region18: #{tpu_custom_call.1} parent=0
    _
  %s4 = ssub.s32 1, %s2
  %s5 = scalar_select 0, %s4, %s2
  $region1: #{tpu_custom_call.1} parent=0
    #allocation2 [shape = 'u8[8192]{0}', space=vmem, size = 0x2000, scoped, tag = 'input window, operand 0, single buffered']
    #allocation3 [shape = 's32[1]{0}', space=sflag, size = 0x4, scoped, tag = 'scoped memory for tpu_custom_call.1']
    #allocation4 [shape = 's32[1]{0}', space=sflag, size = 0x4, scoped, tag = 'scoped memory for tpu_custom_call.1']
    #allocation5 [shape = 'u8[8192]{0}', space=vmem, size = 0x2000, scoped, tag = 'output window, operand 0, single buffered']
    %6 = vsyncpa [#allocation3], 0
    %7 = vsyncpa [#allocation4], 0
    // Predicated region
    $region2: #{tpu_custom_call.1} parent=1 // pred_check
      _
    $region3: #{tpu_custom_call.1} parent=1 // pred_check_branch
      %9 = sbr.rel (0) target = $region5
    $region4: #{tpu_custom_call.1} parent=1 // pred_region
      %11 = vsyncadd [#allocation3], 0
      %s13 = sshll.u32 %s0, 4
      %s14 = int_to_ptr.hbm [resolvable:$true] %s13
      %s15 = sshll.u32 [#allocation2], 4
      %s16 = int_to_ptr.vmem [resolvable:$true] %s15
      %18 = dma.hbm_to_vmem [thread:$0]  %s14, 256, %s16, [#allocation3]
    $region5: #{tpu_custom_call.1} parent=1 // pred_fallthru
      _
    // Predicated region
    $region6: #{tpu_custom_call.1} parent=1 // pred_check
      _
    $region7: #{tpu_custom_call.1} parent=1 // pred_check_branch
      %20 = sbr.rel (0) target = $region9
    $region8: #{tpu_custom_call.1} parent=1 // pred_region
      %22 = dma.done [#allocation3], 256
    $region9: #{tpu_custom_call.1} parent=1 // pred_fallthru
      _
    %v23 = vld [vmem:[#allocation2] sm:$0xff]
    %v24 = vld [vmem:[#allocation2 + $0x8] sm:$0xff]
    %v25 = vmul.f32 %v23, 0.5
    %v26 = vmul.f32 %v24, 0.5
    %v27 = vtanh.pop %v25
    %v28 = vtanh.pop %v26
    %v29 = vmul.f32 %v27, 0.5
    %v30 = vmul.f32 %v28, 0.5
    %v31 = vadd.f32 %v29, 0.5
    %v32 = vadd.f32 %v30, 0.5
    %33 = vst [vmem:[#allocation5] sm:$0xff] %v31
    %34 = vst [vmem:[#allocation5 + $0x8] sm:$0xff] %v32
    // Predicated region
    $region10: #{tpu_custom_call.1} parent=1 // pred_check
      _
    $region11: #{tpu_custom_call.1} parent=1 // pred_check_branch
      %36 = sbr.rel (0) target = $region13
    $region12: #{tpu_custom_call.1} parent=1 // pred_region
      %38 = vsyncadd [#allocation4], 0
      %s40 = sshll.u32 [#allocation5], 4
      %s41 = int_to_ptr.vmem [resolvable:$true] %s40
      %s42 = sshll.u32 %s1, 4
      %s43 = int_to_ptr.hbm [resolvable:$true] %s42
      %45 = dma.vmem_to_hbm [thread:$0]  %s41, 256, %s43, [#allocation4]
    $region13: #{tpu_custom_call.1} parent=1 // pred_fallthru
      _
    // Predicated region
    $region14: #{tpu_custom_call.1} parent=1 // pred_check
      _
    $region15: #{tpu_custom_call.1} parent=1 // pred_check_branch
      %47 = sbr.rel (0) target = $region17
    $region16: #{tpu_custom_call.1} parent=1 // pred_region
      %49 = dma.done [#allocation4], 256
    $region17: #{tpu_custom_call.1} parent=1 // pred_fallthru
      _
    %50 = vsyncpa [#allocation3], 1
    %51 = vsyncpa [#allocation4], 1

</llo_original>
